<compile_context>
chip_gen: v7x
topology: tpu7x:2x2x1
jax: 0.10.0
libtpu: 0.0.40
codegen_flags: <defaults>
</compile_context>

<pallas_src>
import jax
import jax.numpy as jnp
from jax.experimental import pallas as pl
from jax.experimental.pallas import tpu as pltpu

DROP_P = 0.01


def _embed_kernel(x_ref, w_ref, pb_ref, m_ref, o_ref):
    """One M-tile of rows.

    x_ref : (tm, K)  flattened patches
    w_ref : (D, K)   projection weight (conv weight reshaped, NOT pre-transposed)
    pb_ref: (tm, D)  positional encoding with conv bias folded in
    m_ref : (tm, D)  dropout keep/scale mask (1/(1-p) where kept, 0 where dropped)
    o_ref : (tm, D)  output
    """
    y = jnp.dot(x_ref[...], w_ref[...].T,
                preferred_element_type=jnp.float32)      # (tm, D) on the MXU
    o_ref[...] = ((y + pb_ref[...]) * m_ref[...]).astype(o_ref.dtype)


def embedding_forward(x, conv_w, conv_b, pos_encod, key, patch_shape, training=True):
    """x: (B, C, H, W) float32. Returns (B, num_patches, out_channels)."""
    B, C, H, W = x.shape
    ph, pw = patch_shape
    D, Cw, ph_w, pw_w = conv_w.shape
    assert (C, ph, pw) == (Cw, ph_w, pw_w)
    nH, nW = H // ph, W // pw
    P = nH * nW
    K = C * ph * pw
    M = B * P

    # --- glue: extract non-overlapping patches (pure layout work) ---
    # (B, C, nH, ph, nW, pw) -> (B, nH, nW, C, ph, pw) -> (M, K)
    patches = x.reshape(B, C, nH, ph, nW, pw).transpose(0, 2, 4, 1, 3, 5).reshape(M, K)

    # Weight kept as (D, K); kernel does patches @ w.T (avoids a standalone XLA transpose).
    w = conv_w.reshape(D, K)

    # Fold bias into positional encoding, tile over batch to match flattened rows.
    posb = pos_encod.reshape(P, D) + conv_b.reshape(1, D)
    posb = jnp.tile(posb, (B, 1))                                    # (M, D)

    # Dropout (F.dropout training semantics). Pre-scaled keep mask built in the wrapper.
    if training:
        keep = jax.random.uniform(key, (M, D), dtype=jnp.float32) >= DROP_P
        mask = keep.astype(jnp.float32) * (1.0 / (1.0 - DROP_P))
    else:
        mask = jnp.ones((M, D), dtype=jnp.float32)

    # Tile the M (= B*P) axis: one grid step at small shapes, 512-row tiles when large
    # (sized to fit comfortably inside v7x's smaller VMEM with double-buffering).
    tm = M if M <= 512 else 512
    Mp = int(pl.cdiv(M, tm)) * tm
    if Mp != M:
        pad = Mp - M
        patches = jnp.pad(patches, ((0, pad), (0, 0)))
        posb = jnp.pad(posb, ((0, pad), (0, 0)))
        mask = jnp.pad(mask, ((0, pad), (0, 0)))

    out = pl.pallas_call(
        _embed_kernel,
        out_shape=jax.ShapeDtypeStruct((Mp, D), jnp.float32),
        grid_spec=pltpu.PrefetchScalarGridSpec(
            num_scalar_prefetch=0,
            grid=(Mp // tm,),
            in_specs=[
                pl.BlockSpec((tm, K), lambda i: (i, 0)),   # patches tile
                pl.BlockSpec((D, K), lambda i: (0, 0)),    # resident weight
                pl.BlockSpec((tm, D), lambda i: (i, 0)),   # pos + bias tile
                pl.BlockSpec((tm, D), lambda i: (i, 0)),   # dropout mask tile
            ],
            out_specs=pl.BlockSpec((tm, D), lambda i: (i, 0)),
        ),
        compiler_params=pltpu.CompilerParams(
            dimension_semantics=("parallel",)),  # independent row tiles -> megacore OK
    )(patches, w, posb, mask)

    return out[:M].reshape(B, P, D)


if __name__ == "__main__":
    # Small shapes consistent with the module:
    # image 16x16, patch 4x4, in_channels=4, out_channels=32, batch=2
    image_shape = (16, 16)
    patch_shape = (4, 4)
    in_channels = 4
    out_channels = 32
    B = 2
    num_patches = (image_shape[0] // patch_shape[0]) * (image_shape[1] // patch_shape[1])

    key = jax.random.PRNGKey(0)
    kx, kw, kb, kp, kd = jax.random.split(key, 5)

    x = jax.random.normal(kx, (B, in_channels, *image_shape), dtype=jnp.float32)
    conv_w = jax.random.normal(
        kw, (out_channels, in_channels, *patch_shape), dtype=jnp.float32) * 0.02
    conv_b = jax.random.normal(kb, (out_channels,), dtype=jnp.float32) * 0.02
    pos_encod = jax.random.normal(kp, (1, num_patches, out_channels), dtype=jnp.float32)

    # Deterministic sanity check (dropout disabled) against a pure-JAX reference.
    out_eval = embedding_forward(x, conv_w, conv_b, pos_encod, key=kd,
                                 patch_shape=patch_shape, training=False)
    jax.block_until_ready(out_eval)

    ph, pw = patch_shape
    nH, nW = image_shape[0] // ph, image_shape[1] // pw
    K = in_channels * ph * pw
    patches_ref = x.reshape(B, in_channels, nH, ph, nW, pw)
    patches_ref = patches_ref.transpose(0, 2, 4, 1, 3, 5).reshape(B, num_patches, K)
    ref = (jnp.einsum('bpk,dk->bpd', patches_ref, conv_w.reshape(out_channels, K))
           + conv_b.reshape(1, 1, out_channels) + pos_encod)
    assert out_eval.shape == (B, num_patches, out_channels)
    assert jnp.allclose(out_eval, ref, atol=1e-4, rtol=1e-4)

    # Actual module forward (dropout applied, p=0.01 training semantics).
    out = embedding_forward(x, conv_w, conv_b, pos_encod, key=kd,
                            patch_shape=patch_shape, training=True)
    jax.block_until_ready(out)
    assert out.shape == (B, num_patches, out_channels)
    assert bool(jnp.all(jnp.isfinite(out)))
    print("KERNEL_OK")
</pallas_src>

<mosaic_0001>
module attributes {stable_mosaic.version = 11 : i64} {
  func.func @_embed_kernel(%arg0: i32, %arg1: memref<32x64xf32, #tpu.memory_space<vmem>>, %arg2: memref<32x64xf32, #tpu.memory_space<vmem>>, %arg3: memref<32x32xf32, #tpu.memory_space<vmem>>, %arg4: memref<32x32xf32, #tpu.memory_space<vmem>>, %arg5: memref<32x32xf32, #tpu.memory_space<vmem>>) attributes {dimension_semantics = [#tpu.dimension_semantics<parallel>], iteration_bounds = array<i64: 1>, scalar_prefetch = 0 : i64, scratch_operands = 0 : i64, tpu.core_type = #tpu.core_type<tc>, window_params = [{transform_indices = @transform_0, window_bounds = array<i64: 32, 64>}, {pipeline_mode = #tpu.pipeline_mode<synchronous>, transform_indices = @transform_1, window_bounds = array<i64: 32, 64>}, {transform_indices = @transform_2, window_bounds = array<i64: 32, 32>}, {transform_indices = @transform_3, window_bounds = array<i64: 32, 32>}, {transform_indices = @transform_4, window_bounds = array<i64: 32, 32>}]} {
    %c0 = arith.constant 0 : index
    %c0_0 = arith.constant 0 : index
    %0 = vector.load %arg1[%c0, %c0_0] : memref<32x64xf32, #tpu.memory_space<vmem>>, vector<32x64xf32>
    %c0_1 = arith.constant 0 : index
    %c0_2 = arith.constant 0 : index
    %1 = vector.load %arg2[%c0_1, %c0_2] : memref<32x64xf32, #tpu.memory_space<vmem>>, vector<32x64xf32>
    %2 = tpu.transpose %1, [1, 0] : vector<32x64xf32> -> vector<64x32xf32>
    %cst = arith.constant dense<0.000000e+00> : vector<32x32xf32>
    %3 = tpu.matmul %0, %2, %cst {dimension_numbers = #tpu.dot_dimension_numbers<[1], [0], [0], [1], [0, 0, 1, 1], [], []>} : vector<32x64xf32>, vector<64x32xf32>, vector<32x32xf32> -> vector<32x32xf32>
    %c0_3 = arith.constant 0 : index
    %c0_4 = arith.constant 0 : index
    %4 = vector.load %arg3[%c0_3, %c0_4] : memref<32x32xf32, #tpu.memory_space<vmem>>, vector<32x32xf32>
    %5 = arith.addf %3, %4 : vector<32x32xf32>
    %c0_5 = arith.constant 0 : index
    %c0_6 = arith.constant 0 : index
    %6 = vector.load %arg4[%c0_5, %c0_6] : memref<32x32xf32, #tpu.memory_space<vmem>>, vector<32x32xf32>
    %7 = arith.mulf %5, %6 : vector<32x32xf32>
    %c0_7 = arith.constant 0 : index
    %c0_8 = arith.constant 0 : index
    %8 = vector.load %arg5[%c0_7, %c0_8] : memref<32x32xf32, #tpu.memory_space<vmem>>, vector<32x32xf32>
    tpu.vector_store %arg5[%c0_7, %c0_8], %7 {strides = array<i32>} : memref<32x32xf32, #tpu.memory_space<vmem>>, vector<32x32xf32>,
    return
  }
  func.func @transform_0(%arg0: i32) -> (i32, i32) {
    %c0_i32 = arith.constant 0 : i32
    %c0_i32_0 = arith.constant 0 : i32
    return %arg0, %c0_i32 : i32, i32
  }
  func.func @transform_1(%arg0: i32) -> (i32, i32) {
    %c0_i32 = arith.constant 0 : i32
    %c0_i32_0 = arith.constant 0 : i32
    %c0_i32_1 = arith.constant 0 : i32
    return %c0_i32, %c0_i32_0 : i32, i32
  }
  func.func @transform_2(%arg0: i32) -> (i32, i32) {
    %c0_i32 = arith.constant 0 : i32
    %c0_i32_0 = arith.constant 0 : i32
    return %arg0, %c0_i32 : i32, i32
  }
  func.func @transform_3(%arg0: i32) -> (i32, i32) {
    %c0_i32 = arith.constant 0 : i32
    %c0_i32_0 = arith.constant 0 : i32
    return %arg0, %c0_i32 : i32, i32
  }
  func.func @transform_4(%arg0: i32) -> (i32, i32) {
    %c0_i32 = arith.constant 0 : i32
    %c0_i32_0 = arith.constant 0 : i32
    return %arg0, %c0_i32 : i32, i32
  }
}

</mosaic_0001>

<llo_original>
// kernel: tpu_custom_call.1
$region0: #{tpu_custom_call.1}
  #allocation0 [shape = 'u32[]', space=smem, size = 0x4, offset = 0x4, fixed_abs, tag = 'smem constant byte address 0x4 - core index']
  #allocation1 [shape = 'u32[144,128]{1,0:T(1,128)}', space=vmem, size = 0x12000, scoped, tag = 'internal scratch']
  %s0 = inlined_call_operand.hbm [shape: f32[32,64], index: 0, kind: input, shape index: {}]
  %s1 = inlined_call_operand.hbm [shape: f32[32,64], index: 1, kind: input, shape index: {}]
  %s2 = inlined_call_operand.hbm [shape: f32[32,32], index: 2, kind: input, shape index: {}]
  %s3 = inlined_call_operand.hbm [shape: f32[32,32], index: 3, kind: input, shape index: {}]
  %s4 = inlined_call_operand.hbm [shape: f32[32,32], index: 4, kind: output, shape index: {}]
  %s5 = sld [smem:[#allocation0]]
  $region42: #{tpu_custom_call.1} parent=0
    _
  %s7 = ssub.s32 1, %s5
  %s8 = scalar_select 0, %s7, %s5
  $region1: #{tpu_custom_call.1} parent=0
    #allocation2 [shape = 'u8[16384]{0}', space=vmem, size = 0x4000, scoped, tag = 'input window, operand 0, single buffered']
    #allocation3 [shape = 's32[1]{0}', space=sflag, size = 0x4, scoped, tag = 'scoped memory for tpu_custom_call.1']
    #allocation4 [shape = 's32[1]{0}', space=sflag, size = 0x4, scoped, tag = 'scoped memory for tpu_custom_call.1']
    #allocation5 [shape = 'u8[16384]{0}', space=vmem, size = 0x4000, scoped, tag = 'input window, operand 1, single buffered']
    #allocation6 [shape = 's32[1]{0}', space=sflag, size = 0x4, scoped, tag = 'scoped memory for tpu_custom_call.1']
    #allocation7 [shape = 'u8[16384]{0}', space=vmem, size = 0x4000, scoped, tag = 'input window, operand 2, single buffered']
    #allocation8 [shape = 'u8[16384]{0}', space=vmem, size = 0x4000, scoped, tag = 'input window, operand 3, single buffered']
    #allocation9 [shape = 's32[1]{0}', space=sflag, size = 0x4, scoped, tag = 'scoped memory for tpu_custom_call.1']
    #allocation10 [shape = 'u8[16384]{0}', space=vmem, size = 0x4000, scoped, tag = 'output window, operand 0, single buffered']
    %9 = vsyncpa [#allocation3], 0
    %10 = vsyncpa [#allocation6], 0
    %11 = vsyncpa [#allocation9], 0
    %12 = vsyncpa [#allocation4], 0
    // Predicated region
    $region2: #{tpu_custom_call.1} parent=1 // pred_check
      _
    $region3: #{tpu_custom_call.1} parent=1 // pred_check_branch
      %14 = sbr.rel (0) target = $region5
    $region4: #{tpu_custom_call.1} parent=1 // pred_region
      %s16 = ssub.s32 512, 512
      %17 = vsyncadd [#allocation3], %s16
      %s18 = sshll.u32 [#allocation2], 4
      %s19 = int_to_ptr.vmem [resolvable:$true] %s18
      %24 = dma.hbm_to_vmem [thread:$0]  %s0, 512, %s19, [#allocation3], 128, 128, 8
    $region5: #{tpu_custom_call.1} parent=1 // pred_fallthru
      _
    // Predicated region
    $region6: #{tpu_custom_call.1} parent=1 // pred_check
      _
    $region7: #{tpu_custom_call.1} parent=1 // pred_check_branch
      %26 = sbr.rel (0) target = $region9
    $region8: #{tpu_custom_call.1} parent=1 // pred_region
      %s28 = ssub.s32 512, 512
      %29 = vsyncadd [#allocation6], %s28
      %s30 = sshll.u32 [#allocation5], 4
      %s31 = int_to_ptr.vmem [resolvable:$true] %s30
      %36 = dma.hbm_to_vmem [thread:$0]  %s1, 512, %s31, [#allocation6], 128, 128, 8
    $region9: #{tpu_custom_call.1} parent=1 // pred_fallthru
      _
    // Predicated region
    $region10: #{tpu_custom_call.1} parent=1 // pred_check
      _
    $region11: #{tpu_custom_call.1} parent=1 // pred_check_branch
      %38 = sbr.rel (0) target = $region13
    $region12: #{tpu_custom_call.1} parent=1 // pred_region
      %s40 = ssub.s32 512, 512
      %41 = vsyncadd [#allocation6], %s40
      %s42 = sshll.u32 [#allocation7], 4
      %s43 = int_to_ptr.vmem [resolvable:$true] %s42
      %48 = dma.hbm_to_vmem [thread:$0]  %s2, 512, %s43, [#allocation6], 128, 128, 8
    $region13: #{tpu_custom_call.1} parent=1 // pred_fallthru
      _
    // Predicated region
    $region14: #{tpu_custom_call.1} parent=1 // pred_check
      _
    $region15: #{tpu_custom_call.1} parent=1 // pred_check_branch
      %50 = sbr.rel (0) target = $region17
    $region16: #{tpu_custom_call.1} parent=1 // pred_region
      %s52 = ssub.s32 512, 512
      %53 = vsyncadd [#allocation9], %s52
      %s54 = sshll.u32 [#allocation8], 4
      %s55 = int_to_ptr.vmem [resolvable:$true] %s54
      %60 = dma.hbm_to_vmem [thread:$0]  %s3, 512, %s55, [#allocation9], 128, 128, 8
    $region17: #{tpu_custom_call.1} parent=1 // pred_fallthru
      _
    // Predicated region
    $region18: #{tpu_custom_call.1} parent=1 // pred_check
      _
    $region19: #{tpu_custom_call.1} parent=1 // pred_check_branch
      %62 = sbr.rel (0) target = $region21
    $region20: #{tpu_custom_call.1} parent=1 // pred_region
      %63 = dma.done [#allocation3], 512
    $region21: #{tpu_custom_call.1} parent=1 // pred_fallthru
      _
    // Predicated region
    $region22: #{tpu_custom_call.1} parent=1 // pred_check
      _
    $region23: #{tpu_custom_call.1} parent=1 // pred_check_branch
      %65 = sbr.rel (0) target = $region25
    $region24: #{tpu_custom_call.1} parent=1 // pred_region
      %66 = dma.done [#allocation6], 512
    $region25: #{tpu_custom_call.1} parent=1 // pred_fallthru
      _
    // Predicated region
    $region26: #{tpu_custom_call.1} parent=1 // pred_check
      _
    $region27: #{tpu_custom_call.1} parent=1 // pred_check_branch
      %68 = sbr.rel (0) target = $region29
    $region28: #{tpu_custom_call.1} parent=1 // pred_region
      %69 = dma.done [#allocation6], 512
    $region29: #{tpu_custom_call.1} parent=1 // pred_fallthru
      _
    // Predicated region
    $region30: #{tpu_custom_call.1} parent=1 // pred_check
      _
    $region31: #{tpu_custom_call.1} parent=1 // pred_check_branch
      %71 = sbr.rel (0) target = $region33
    $region32: #{tpu_custom_call.1} parent=1 // pred_region
      %72 = dma.done [#allocation9], 512
    $region33: #{tpu_custom_call.1} parent=1 // pred_fallthru
      _
    %v73 = vld [vmem:[#allocation2] sm:$0xff]
    %v74 = vld [vmem:[#allocation2 + $0x8] sm:$0xff]
    %v75 = vld [vmem:[#allocation2 + $0x10] sm:$0xff]
    %v76 = vld [vmem:[#allocation2 + $0x18] sm:$0xff]
    %v77 = vld [vmem:[#allocation5] sm:$0xff]
    %v78 = vld [vmem:[#allocation5 + $0x8] sm:$0xff]
    %v79 = vld [vmem:[#allocation5 + $0x10] sm:$0xff]
    %v80 = vld [vmem:[#allocation5 + $0x18] sm:$0xff]
    %v81 = vld [vmem:[#allocation7] sm:$0xff]
    %v82 = vld [vmem:[#allocation7 + $0x8] sm:$0xff]
    %v83 = vld [vmem:[#allocation7 + $0x10] sm:$0xff]
    %v84 = vld [vmem:[#allocation7 + $0x18] sm:$0xff]
    %vm85 = vcmask 523264
    %v87 = vsel %vm85, %v73, 0
    %v90 = vsel %vm85, %v74, 0
    %v93 = vsel %vm85, %v75, 0
    %v96 = vsel %vm85, %v76, 0
    %v99 = vsel %vm85, %v77, 0
    %v102 = vsel %vm85, %v78, 0
    %v105 = vsel %vm85, %v79, 0
    %v108 = vsel %vm85, %v80, 0
    %110 = vmatprep.subr.mxu0 0.0
    %111 = vmatpush1.xpose.msra.mxu0 %v99
    %112 = vmatprep.subr.mxu0 0.0
    %113 = vmatpush1.xpose.msra.mxu0 %v102
    %114 = vmatprep.subr.mxu0 0.0
    %115 = vmatpush1.xpose.msra.mxu0 %v105
    %116 = vmatprep.subr.mxu0 0.0
    %117 = vmatpush1.xpose.msra.mxu0 %v108
    %118 = vmatprep.subr.mxu0 0.0
    %119 = vmatpush1.xpose.msra.mxu0 0.0
    %120 = vmatprep.subr.mxu0 0.0
    %121 = vmatpush1.xpose.msra.mxu0 0.0
    %122 = vmatprep.subr.mxu0 0.0
    %123 = vmatpush1.xpose.msra.mxu0 0.0
    %124 = vmatprep.subr.mxu0 0.0
    %125 = vmatpush1.xpose.msra.mxu0 0.0
    %126 = vmatprep.subr.mxu0 0.0
    %127 = vmatpush1.xpose.msra.mxu0 0.0
    %128 = vmatprep.subr.mxu0 0.0
    %129 = vmatpush1.xpose.msra.mxu0 0.0
    %130 = vmatprep.subr.mxu0 0.0
    %131 = vmatpush1.xpose.msra.mxu0 0.0
    %132 = vmatprep.subr.mxu0 0.0
    %133 = vmatpush1.xpose.msra.mxu0 0.0
    %134 = vmatprep.subr.mxu0 0.0
    %135 = vmatpush1.xpose.msra.mxu0 0.0
    %136 = vmatprep.subr.mxu0 0.0
    %137 = vmatpush1.xpose.msra.mxu0 0.0
    %138 = vmatprep.subr.mxu0 0.0
    %139 = vmatpush1.xpose.msra.mxu0 0.0
    %140 = vmatprep.subr.mxu0 0.0
    %141 = vmatpush1.xpose.msra.mxu0 0.0
    %142 = vmatprep.subr.mxu0 0.0
    %143 = vmatpush1.xpose.msra.mxu0 0.0
    %144 = vmatprep.subr.mxu0 0.0
    %145 = vmatpush1.xpose.msra.mxu0 0.0
    %146 = vmatprep.subr.mxu0 0.0
    %147 = vmatpush1.xpose.msra.mxu0 0.0
    %148 = vmatprep.subr.mxu0 0.0
    %149 = vmatpush1.xpose.msra.mxu0 0.0
    %150 = vmatprep.subr.mxu0 0.0
    %151 = vmatpush1.xpose.msra.mxu0 0.0
    %152 = vmatprep.subr.mxu0 0.0
    %153 = vmatpush1.xpose.msra.mxu0 0.0
    %154 = vmatprep.subr.mxu0 0.0
    %155 = vmatpush1.xpose.msra.mxu0 0.0
    %156 = vmatprep.subr.mxu0 0.0
    %157 = vmatpush1.xpose.msra.mxu0 0.0
    %158 = vmatprep.subr.mxu0 0.0
    %159 = vmatpush1.xpose.msra.mxu0 0.0
    %160 = vmatprep.subr.mxu0 0.0
    %161 = vmatpush1.xpose.msra.mxu0 0.0
    %162 = vmatprep.subr.mxu0 0.0
    %163 = vmatpush1.xpose.msra.mxu0 0.0
    %164 = vmatprep.subr.mxu0 0.0
    %165 = vmatpush1.xpose.msra.mxu0 0.0
    %166 = vmatprep.subr.mxu0 0.0
    %167 = vmatpush1.xpose.msra.mxu0 0.0
    %168 = vmatprep.subr.mxu0 0.0
    %169 = vmatpush1.xpose.msra.mxu0 0.0
    %170 = vmatprep.subr.mxu0 0.0
    %171 = vmatpush1.xpose.msra.mxu0 0.0
    %172 = vmatprep.subr.mxu0 0.0
    %173 = vmatpush1.xpose.msra.mxu0 0.0
    %174 = vmatprep.mubr.f32.mxu0 0.0
    %175 = vmatmul.mubr.f32.gmra.mrb[0].mxu0 %v87
    %v176 = vpop.f32.mrb[0].mxu0
    %v177 = vadd.f32 %v81, %v176
    %v178 = vpop.f32.mrb[0].mxu0
    %179 = vmatprep.mubr.f32.mxu0 0.0
    %180 = vmatmul.mubr.f32.gmra.mrb[0].mxu0 %v90
    %v181 = vpop.f32.mrb[0].mxu0
    %v182 = vadd.f32 %v82, %v181
    %v183 = vpop.f32.mrb[0].mxu0
    %184 = vmatprep.mubr.f32.mxu0 0.0
    %185 = vmatmul.mubr.f32.gmra.mrb[0].mxu0 %v93
    %v186 = vpop.f32.mrb[0].mxu0
    %v187 = vadd.f32 %v83, %v186
    %v188 = vpop.f32.mrb[0].mxu0
    %189 = vmatprep.mubr.f32.mxu0 0.0
    %190 = vmatmul.mubr.f32.gmra.mrb[0].mxu0 %v96
    %v191 = vpop.f32.mrb[0].mxu0
    %v192 = vadd.f32 %v84, %v191
    %v193 = vpop.f32.mrb[0].mxu0
    %194 = vdwg.mxu0
    %v195 = vld [vmem:[#allocation8] sm:$0xff]
    %v196 = vld [vmem:[#allocation8 + $0x8] sm:$0xff]
    %v197 = vld [vmem:[#allocation8 + $0x10] sm:$0xff]
    %v198 = vld [vmem:[#allocation8 + $0x18] sm:$0xff]
    %v199 = vmul.f32 %v177, %v195
    %v200 = vmul.f32 %v182, %v196
    %v201 = vmul.f32 %v187, %v197
    %v202 = vmul.f32 %v192, %v198
    %vm203 = vcmask 261120
    %204 = vst.msk [vmem:[#allocation10] sm:$0xff] %vm203, %v199
    %205 = vst.msk [vmem:[#allocation10 + $0x8] sm:$0xff] %vm203, %v200
    %206 = vst.msk [vmem:[#allocation10 + $0x10] sm:$0xff] %vm203, %v201
    %207 = vst.msk [vmem:[#allocation10 + $0x18] sm:$0xff] %vm203, %v202
    // Predicated region
    $region34: #{tpu_custom_call.1} parent=1 // pred_check
      _
    $region35: #{tpu_custom_call.1} parent=1 // pred_check_branch
      %209 = sbr.rel (0) target = $region37
    $region36: #{tpu_custom_call.1} parent=1 // pred_region
      %s211 = ssub.s32 512, 512
      %212 = vsyncadd [#allocation4], %s211
      %s213 = sshll.u32 [#allocation10], 4
      %s214 = int_to_ptr.vmem [resolvable:$true] %s213
      %219 = dma.vmem_to_hbm [thread:$0]  %s214, 512, %s4, [#allocation4], 128, 128, 8
    $region37: #{tpu_custom_call.1} parent=1 // pred_fallthru
      _
    // Predicated region
    $region38: #{tpu_custom_call.1} parent=1 // pred_check
      _
    $region39: #{tpu_custom_call.1} parent=1 // pred_check_branch
      %221 = sbr.rel (0) target = $region41
    $region40: #{tpu_custom_call.1} parent=1 // pred_region
      %222 = dma.done [#allocation4], 512
    $region41: #{tpu_custom_call.1} parent=1 // pred_fallthru
      _
    %223 = vsyncpa [#allocation3], 1
    %224 = vsyncpa [#allocation6], 1
    %225 = vsyncpa [#allocation9], 1
    %226 = vsyncpa [#allocation4], 1

</llo_original>
